<compile_context>
chip_gen: v7x
topology: tpu7x:2x2x1
jax: 0.10.0
libtpu: 0.0.40
codegen_flags: <defaults>
</compile_context>

<pallas_src>
import functools

import jax
import jax.numpy as jnp
from jax.experimental import pallas as pl
from jax.experimental.pallas import tpu as pltpu


# ------------------------------ kernel body ---------------------------------

def _sdpa_kernel(*refs, inv_temp, has_mask, return_attn):
    idx = 0
    q_ref = refs[idx]; idx += 1
    k_ref = refs[idx]; idx += 1
    v_ref = refs[idx]; idx += 1
    bias_ref = None
    if has_mask:
        bias_ref = refs[idx]; idx += 1
    out_ref = refs[idx]; idx += 1
    attn_ref = refs[idx] if return_attn else None

    BB, HB, TQ, Dk = q_ref.shape
    Lk = k_ref.shape[2]
    Dv = v_ref.shape[3]
    G = BB * HB

    # Collapse (block-batch, block-head) into one leading batch dim; leading-dim
    # reshapes do not touch the (sublane, lane) layout.
    q = q_ref[...].reshape(G, TQ, Dk)
    k = k_ref[...].reshape(G, Lk, Dk)
    v = v_ref[...].reshape(G, Lk, Dv)

    # Scores on the MXU, f32 accumulation; k consumed in stored layout (no transpose).
    scores = jnp.einsum("gqd,gkd->gqk", q * inv_temp, k,
                        preferred_element_type=jnp.float32)      # (G, TQ, Lk) f32

    if has_mask:
        # Additive bias in {0, -1e9}; head dim may be 1 -> broadcast (leading dim only).
        bias = jnp.broadcast_to(bias_ref[...], (BB, HB, TQ, Lk)).reshape(G, TQ, Lk)
        scores = scores + bias

    # Numerically-stable softmax in f32; the divide goes to the EUP via approx recip.
    s_max = jnp.max(scores, axis=-1, keepdims=True)
    e = jnp.exp(scores - s_max)
    denom = jnp.sum(e, axis=-1, keepdims=True)
    attn = e * pl.reciprocal(denom, approx=True)

    # TODO(synk): nn.Dropout(attn_dropout) is identity here (inference mode).

    out = jnp.einsum("gqk,gkd->gqd", attn.astype(v_ref.dtype), v,
                     preferred_element_type=jnp.float32)         # (G, TQ, Dv)

    out_ref[...] = out.reshape(BB, HB, TQ, Dv).astype(out_ref.dtype)
    if return_attn:
        attn_ref[...] = attn.reshape(BB, HB, TQ, Lk).astype(attn_ref.dtype)


# -------------------------------- wrapper ------------------------------------

def scaled_dot_product_attention(q, k, v, mask=None, *, temperature, return_attn=True):
    """q: (B,H,Lq,Dk), k: (B,H,Lk,Dk), v: (B,H,Lk,Dv); mask broadcastable to
    (B,H,Lq,Lk); positions with mask==0 get -1e9 added before softmax.
    Returns (output (B,H,Lq,Dv), attn (B,H,Lq,Lk) or None) in q.dtype, mirroring
    the PyTorch module (attn is returned in the input dtype)."""
    B, H, Lq, Dk = q.shape
    Lk = k.shape[2]
    Dv = v.shape[3]
    inv_temp = 1.0 / float(temperature)
    isz = jnp.dtype(q.dtype).itemsize
    has_mask = mask is not None

    # ---------------- tile selection ----------------
    # Whole-problem single-step footprint estimate (bytes).
    whole = (B * H * (Lq * Dk + Lk * Dk + Lk * Dv + Lq * Dv) * isz
             + B * H * Lq * Lk * isz                 # attn out
             + B * Lq * Lk * 4)                      # bias (no head broadcast)
    if whole <= (2 << 20):
        # Tiny problem: one grid step, no per-step / pipeline overhead.
        BB, HB, TQ = B, H, Lq
    else:
        BB, HB = 1, 1
        # TQ must be a multiple of 8 or equal the full Lq.  Sized so the f32
        # (TQ, Lk) score/attn tiles stay small even under v7x's 64 MiB VMEM.
        TQ = Lq if Lq <= 256 else 256

    grid = (pl.cdiv(B, BB), pl.cdiv(H, HB), pl.cdiv(Lq, TQ))

    # ---------------- specs & args ----------------
    in_specs = [
        pl.BlockSpec((BB, HB, TQ, Dk), lambda b, h, qi: (b, h, qi, 0)),
        # k/v index_maps ignore the (innermost) q-tile axis -> blocks stay resident.
        pl.BlockSpec((BB, HB, Lk, Dk), lambda b, h, qi: (b, h, 0, 0)),
        pl.BlockSpec((BB, HB, Lk, Dv), lambda b, h, qi: (b, h, 0, 0)),
    ]
    args = [q, k, v]

    h_full = False
    bias_bytes = 0
    if has_mask:
        m4 = jnp.asarray(mask)
        m4 = m4.reshape((1,) * (4 - m4.ndim) + m4.shape)
        h_full = (m4.shape[1] != 1)
        # Additive f32 bias; keep the head dim un-broadcast when possible.
        bias = jnp.where(m4 == 0, jnp.float32(-1e9), jnp.float32(0.0))
        bias = jnp.broadcast_to(bias, (B, H if h_full else 1, Lq, Lk))
        if h_full:
            in_specs.append(
                pl.BlockSpec((BB, HB, TQ, Lk), lambda b, h, qi: (b, h, qi, 0)))
        else:
            in_specs.append(
                pl.BlockSpec((BB, 1, TQ, Lk), lambda b, h, qi: (b, 0, qi, 0)))
        args.append(bias)
        bias_bytes = bias.size * 4

    out_shapes = [jax.ShapeDtypeStruct((B, H, Lq, Dv), q.dtype)]
    out_specs = [pl.BlockSpec((BB, HB, TQ, Dv), lambda b, h, qi: (b, h, qi, 0))]
    if return_attn:
        out_shapes.append(jax.ShapeDtypeStruct((B, H, Lq, Lk), q.dtype))
        out_specs.append(pl.BlockSpec((BB, HB, TQ, Lk), lambda b, h, qi: (b, h, qi, 0)))

    # ---------------- VMEM limit & cost estimate ----------------
    tile_in = BB * HB * (TQ * Dk + Lk * Dk + Lk * Dv) * isz
    if has_mask:
        tile_in += BB * (HB if h_full else 1) * TQ * Lk * 4
    tile_out = BB * HB * TQ * Dv * isz + (BB * HB * TQ * Lk * isz if return_attn else 0)
    scratch = 3 * BB * HB * TQ * Lk * 4          # f32 scores / exp / attn intermediates
    vmem_bytes = 2 * (tile_in + tile_out) + scratch   # 2x: double-buffered operands
    vmem_limit = int(min(max(2 * vmem_bytes, 16 << 20), 64 << 20))

    flops = 2 * B * H * Lq * Lk * (Dk + Dv) + 5 * B * H * Lq * Lk
    transcendentals = B * H * Lq * (Lk + 1)      # exp + per-row reciprocal
    bytes_accessed = ((q.size + k.size + v.size) * isz + bias_bytes
                      + B * H * Lq * Dv * isz
                      + (B * H * Lq * Lk * isz if return_attn else 0))
    cost = pl.CostEstimate(flops=int(flops), transcendentals=int(transcendentals),
                           bytes_accessed=int(bytes_accessed))

    kernel = functools.partial(_sdpa_kernel, inv_temp=inv_temp,
                               has_mask=has_mask, return_attn=return_attn)

    results = pl.pallas_call(
        kernel,
        out_shape=tuple(out_shapes),
        grid=grid,
        in_specs=in_specs,
        out_specs=tuple(out_specs),
        compiler_params=pltpu.CompilerParams(
            dimension_semantics=("parallel", "parallel", "parallel"),
            vmem_limit_bytes=vmem_limit),
        cost_estimate=cost,
    )(*args)

    if return_attn:
        return results[0], results[1]
    return results[0], None


# ------------------------------ pure-JAX reference ---------------------------

def _reference(q, k, v, temperature, mask=None):
    attn = jnp.einsum("bhqd,bhkd->bhqk", q / temperature, k,
                      precision=jax.lax.Precision.HIGHEST)
    if mask is not None:
        attn = jnp.where(mask == 0, -1e9, attn)
    attn = jax.nn.softmax(attn, axis=-1)
    out = jnp.einsum("bhqk,bhkd->bhqd", attn, v,
                     precision=jax.lax.Precision.HIGHEST)
    return out, attn


# ----------------------------------- main -------------------------------------

if __name__ == "__main__":
    # Small shapes consistent with the transformerV2 usage (n_head=2, d_k=d_v=16).
    B, H, Lq, Lk, Dk, Dv = 2, 2, 8, 8, 16, 16
    temperature = float(Dk) ** 0.5

    root = jax.random.PRNGKey(0)
    kq, kk, kv = jax.random.split(root, 3)
    q = jax.random.normal(kq, (B, H, Lq, Dk), jnp.float32)
    k = jax.random.normal(kk, (B, H, Lk, Dk), jnp.float32)
    v = jax.random.normal(kv, (B, H, Lk, Dv), jnp.float32)
    # (B, 1, Lq, Lk) causal mask, as the transformer builds it (broadcast over heads).
    mask = jnp.broadcast_to(
        jnp.tril(jnp.ones((Lq, Lk), jnp.int32))[None, None], (B, 1, Lq, Lk))

    fwd = jax.jit(functools.partial(scaled_dot_product_attention,
                                    temperature=temperature))
    fwd_no_attn = jax.jit(functools.partial(scaled_dot_product_attention,
                                            temperature=temperature,
                                            return_attn=False))

    out, attn = fwd(q, k, v)              # mask=None path
    out_m, attn_m = fwd(q, k, v, mask)    # masked path
    out_na, attn_na = fwd_no_attn(q, k, v, mask)   # attn writeback elided
    jax.block_until_ready((out, attn, out_m, attn_m, out_na))

    # Validate against the pure-JAX reference.  Tolerance slightly loosened
    # (2e-3) because the softmax denominator uses the EUP approx reciprocal.
    r_out, r_attn = _reference(q, k, v, temperature)
    rm_out, rm_attn = _reference(q, k, v, temperature, mask)
    assert out.shape == (B, H, Lq, Dv) and attn.shape == (B, H, Lq, Lk)
    assert out.dtype == q.dtype and attn.dtype == q.dtype   # attn follows input dtype
    assert attn_na is None
    checks = ((out, r_out), (attn, r_attn),
              (out_m, rm_out), (attn_m, rm_attn), (out_na, rm_out))
    for got, want in checks:
        assert jnp.allclose(got, want, atol=2e-3, rtol=2e-3), \
            float(jnp.max(jnp.abs(got - want)))

    print("KERNEL_OK")
</pallas_src>

<mosaic_0001>
module attributes {stable_mosaic.version = 11 : i64} {
  func.func @_sdpa_kernel(%arg0: i32, %arg1: i32, %arg2: i32, %arg3: memref<2x2x8x16xf32, #tpu.memory_space<vmem>>, %arg4: memref<2x2x8x16xf32, #tpu.memory_space<vmem>>, %arg5: memref<2x2x8x16xf32, #tpu.memory_space<vmem>>, %arg6: memref<2x2x8x16xf32, #tpu.memory_space<vmem>>, %arg7: memref<2x2x8x8xf32, #tpu.memory_space<vmem>>) attributes {dimension_semantics = [#tpu.dimension_semantics<parallel>, #tpu.dimension_semantics<parallel>, #tpu.dimension_semantics<parallel>], iteration_bounds = array<i64: 1, 1, 1>, scalar_prefetch = 0 : i64, scratch_operands = 0 : i64, tpu.core_type = #tpu.core_type<tc>, window_params = [{transform_indices = @transform_0, window_bounds = array<i64: 2, 2, 8, 16>}, {transform_indices = @transform_1, window_bounds = array<i64: 2, 2, 8, 16>}, {transform_indices = @transform_2, window_bounds = array<i64: 2, 2, 8, 16>}, {transform_indices = @transform_3, window_bounds = array<i64: 2, 2, 8, 16>}, {transform_indices = @transform_4, window_bounds = array<i64: 2, 2, 8, 8>}]} {
    %c0 = arith.constant 0 : index
    %c0_0 = arith.constant 0 : index
    %c0_1 = arith.constant 0 : index
    %c0_2 = arith.constant 0 : index
    %0 = vector.load %arg3[%c0, %c0_0, %c0_1, %c0_2] : memref<2x2x8x16xf32, #tpu.memory_space<vmem>>, vector<2x2x8x16xf32>
    %1 = vector.shape_cast %0 : vector<2x2x8x16xf32> to vector<4x8x16xf32>
    %c0_3 = arith.constant 0 : index
    %c0_4 = arith.constant 0 : index
    %c0_5 = arith.constant 0 : index
    %c0_6 = arith.constant 0 : index
    %2 = vector.load %arg4[%c0_3, %c0_4, %c0_5, %c0_6] : memref<2x2x8x16xf32, #tpu.memory_space<vmem>>, vector<2x2x8x16xf32>
    %3 = vector.shape_cast %2 : vector<2x2x8x16xf32> to vector<4x8x16xf32>
    %c0_7 = arith.constant 0 : index
    %c0_8 = arith.constant 0 : index
    %c0_9 = arith.constant 0 : index
    %c0_10 = arith.constant 0 : index
    %4 = vector.load %arg5[%c0_7, %c0_8, %c0_9, %c0_10] : memref<2x2x8x16xf32, #tpu.memory_space<vmem>>, vector<2x2x8x16xf32>
    %5 = vector.shape_cast %4 : vector<2x2x8x16xf32> to vector<4x8x16xf32>
    %cst = arith.constant 2.500000e-01 : f32
    %6 = vector.broadcast %cst : f32 to vector<4x8x16xf32>
    %7 = arith.mulf %1, %6 : vector<4x8x16xf32>
    "tpu.trace_start"() <{level = 10 : i32, message = "gqd,gkd->gqk"}> : () -> ()
    %cst_11 = arith.constant dense<0.000000e+00> : vector<4x8x8xf32>
    %8 = tpu.matmul %7, %3, %cst_11 {dimension_numbers = #tpu.dot_dimension_numbers<[2], [2], [1], [1], [0, 0, 0, 1, 1, 1], [0], [0]>} : vector<4x8x16xf32>, vector<4x8x16xf32>, vector<4x8x8xf32> -> vector<4x8x8xf32>
    "tpu.trace_stop"() : () -> ()
    %cst_12 = arith.constant dense<0xFF800000> : vector<4x8xf32>
    %9 = vector.multi_reduction <maximumf>, %8, %cst_12 [2] : vector<4x8x8xf32> to vector<4x8xf32>
    %10 = vector.shape_cast %9 : vector<4x8xf32> to vector<4x8x1xf32>
    %11 = vector.broadcast %10 : vector<4x8x1xf32> to vector<4x8x8xf32>
    %12 = arith.subf %8, %11 : vector<4x8x8xf32>
    %13 = math.exp %12 : vector<4x8x8xf32>
    %cst_13 = arith.constant dense<0.000000e+00> : vector<4x8xf32>
    %14 = vector.multi_reduction <add>, %13, %cst_13 [2] : vector<4x8x8xf32> to vector<4x8xf32>
    %15 = vector.shape_cast %14 : vector<4x8xf32> to vector<4x8x1xf32>
    %16 = tpu.reciprocal %15 {approx = true} : vector<4x8x1xf32> -> vector<4x8x1xf32>
    %17 = vector.broadcast %16 : vector<4x8x1xf32> to vector<4x8x8xf32>
    %18 = arith.mulf %13, %17 : vector<4x8x8xf32>
    "tpu.trace_start"() <{level = 10 : i32, message = "gqk,gkd->gqd"}> : () -> ()
    %cst_14 = arith.constant dense<0.000000e+00> : vector<4x8x16xf32>
    %19 = tpu.matmul %18, %5, %cst_14 {dimension_numbers = #tpu.dot_dimension_numbers<[2], [1], [1], [2], [0, 0, 0, 1, 1, 2], [0], [0]>} : vector<4x8x8xf32>, vector<4x8x16xf32>, vector<4x8x16xf32> -> vector<4x8x16xf32>
    "tpu.trace_stop"() : () -> ()
    %20 = vector.shape_cast %19 : vector<4x8x16xf32> to vector<2x2x8x16xf32>
    %c0_15 = arith.constant 0 : index
    %c0_16 = arith.constant 0 : index
    %c0_17 = arith.constant 0 : index
    %c0_18 = arith.constant 0 : index
    %21 = vector.load %arg6[%c0_15, %c0_16, %c0_17, %c0_18] : memref<2x2x8x16xf32, #tpu.memory_space<vmem>>, vector<2x2x8x16xf32>
    tpu.vector_store %arg6[%c0_15, %c0_16, %c0_17, %c0_18], %20 {strides = array<i32>} : memref<2x2x8x16xf32, #tpu.memory_space<vmem>>, vector<2x2x8x16xf32>,
    %22 = vector.shape_cast %18 : vector<4x8x8xf32> to vector<2x2x8x8xf32>
    %c0_19 = arith.constant 0 : index
    %c0_20 = arith.constant 0 : index
    %c0_21 = arith.constant 0 : index
    %c0_22 = arith.constant 0 : index
    %23 = vector.load %arg7[%c0_19, %c0_20, %c0_21, %c0_22] : memref<2x2x8x8xf32, #tpu.memory_space<vmem>>, vector<2x2x8x8xf32>
    tpu.vector_store %arg7[%c0_19, %c0_20, %c0_21, %c0_22], %22 {strides = array<i32>} : memref<2x2x8x8xf32, #tpu.memory_space<vmem>>, vector<2x2x8x8xf32>,
    return
  }
  func.func @transform_0(%arg0: i32, %arg1: i32, %arg2: i32) -> (i32, i32, i32, i32) {
    %c0_i32 = arith.constant 0 : i32
    %c0_i32_0 = arith.constant 0 : i32
    return %arg0, %arg1, %arg2, %c0_i32 : i32, i32, i32, i32
  }
  func.func @transform_1(%arg0: i32, %arg1: i32, %arg2: i32) -> (i32, i32, i32, i32) {
    %c0_i32 = arith.constant 0 : i32
    %c0_i32_0 = arith.constant 0 : i32
    %c0_i32_1 = arith.constant 0 : i32
    return %arg0, %arg1, %c0_i32, %c0_i32_0 : i32, i32, i32, i32
  }
  func.func @transform_2(%arg0: i32, %arg1: i32, %arg2: i32) -> (i32, i32, i32, i32) {
    %c0_i32 = arith.constant 0 : i32
    %c0_i32_0 = arith.constant 0 : i32
    %c0_i32_1 = arith.constant 0 : i32
    return %arg0, %arg1, %c0_i32, %c0_i32_0 : i32, i32, i32, i32
  }
  func.func @transform_3(%arg0: i32, %arg1: i32, %arg2: i32) -> (i32, i32, i32, i32) {
    %c0_i32 = arith.constant 0 : i32
    %c0_i32_0 = arith.constant 0 : i32
    return %arg0, %arg1, %arg2, %c0_i32 : i32, i32, i32, i32
  }
  func.func @transform_4(%arg0: i32, %arg1: i32, %arg2: i32) -> (i32, i32, i32, i32) {
    %c0_i32 = arith.constant 0 : i32
    %c0_i32_0 = arith.constant 0 : i32
    return %arg0, %arg1, %arg2, %c0_i32 : i32, i32, i32, i32
  }
}

</mosaic_0001>

<llo_original>
// kernel: scaled_dot_product_attention.1
$region0: #{scaled_dot_product_attention.1}
  #allocation0 [shape = 'u32[]', space=smem, size = 0x4, offset = 0x4, fixed_abs, tag = 'smem constant byte address 0x4 - core index']
  #allocation1 [shape = 'u32[144,128]{1,0:T(1,128)}', space=vmem, size = 0x12000, scoped, tag = 'internal scratch']
  %s0 = inlined_call_operand.hbm [shape: f32[2,2,8,16], index: 0, kind: input, shape index: {}]
  %s1 = inlined_call_operand.hbm [shape: f32[2,2,8,16], index: 1, kind: input, shape index: {}]
  %s2 = inlined_call_operand.hbm [shape: f32[2,2,8,16], index: 2, kind: input, shape index: {}]
  %s3 = inlined_call_operand.hbm [shape: f32[2,2,8,16], index: 3, kind: output, shape index: {0}]
  %s4 = inlined_call_operand.hbm [shape: f32[2,2,8,8], index: 4, kind: output, shape index: {1}]
  %5 = xla_tuple %s3, %s4
  %s6 = sld [smem:[#allocation0]]
  $region42: #{scaled_dot_product_attention.1} parent=0
    _
  %s8 = ssub.s32 1, %s6
  %s9 = scalar_select 0, %s8, %s6
  $region1: #{scaled_dot_product_attention.1} parent=0
    #allocation2 [shape = 'u8[16384]{0}', space=vmem, size = 0x4000, scoped, tag = 'input window, operand 0, single buffered']
    #allocation3 [shape = 's32[1]{0}', space=sflag, size = 0x4, scoped, tag = 'scoped memory for scaled_dot_product_attention.1']
    #allocation4 [shape = 's32[1]{0}', space=sflag, size = 0x4, scoped, tag = 'scoped memory for scaled_dot_product_attention.1']
    #allocation5 [shape = 'u8[16384]{0}', space=vmem, size = 0x4000, scoped, tag = 'input window, operand 1, single buffered']
    #allocation6 [shape = 's32[1]{0}', space=sflag, size = 0x4, scoped, tag = 'scoped memory for scaled_dot_product_attention.1']
    #allocation7 [shape = 'u8[16384]{0}', space=vmem, size = 0x4000, scoped, tag = 'input window, operand 2, single buffered']
    #allocation8 [shape = 'u8[16384]{0}', space=vmem, size = 0x4000, scoped, tag = 'output window, operand 0, single buffered']
    #allocation9 [shape = 'u8[16384]{0}', space=vmem, size = 0x4000, scoped, tag = 'output window, operand 1, single buffered']
    #allocation10 [shape = 's32[1]{0}', space=sflag, size = 0x4, scoped, tag = 'scoped memory for scaled_dot_product_attention.1']
    %10 = vsyncpa [#allocation3], 0
    %11 = vsyncpa [#allocation6], 0
    %12 = vsyncpa [#allocation4], 0
    %13 = vsyncpa [#allocation10], 0
    // Predicated region
    $region2: #{scaled_dot_product_attention.1} parent=1 // pred_check
      _
    $region3: #{scaled_dot_product_attention.1} parent=1 // pred_check_branch
      %15 = sbr.rel (0) target = $region5
    $region4: #{scaled_dot_product_attention.1} parent=1 // pred_region
      %s17 = ssub.s32 512, 512
      %18 = vsyncadd [#allocation3], %s17
      %s19 = sshll.u32 [#allocation2], 4
      %s20 = int_to_ptr.vmem [resolvable:$true] %s19
      %25 = dma.hbm_to_vmem [thread:$0]  %s0, 512, %s20, [#allocation3], 128, 128, 8
    $region5: #{scaled_dot_product_attention.1} parent=1 // pred_fallthru
      _
    // Predicated region
    $region6: #{scaled_dot_product_attention.1} parent=1 // pred_check
      _
    $region7: #{scaled_dot_product_attention.1} parent=1 // pred_check_branch
      %27 = sbr.rel (0) target = $region9
    $region8: #{scaled_dot_product_attention.1} parent=1 // pred_region
      %s29 = ssub.s32 512, 512
      %30 = vsyncadd [#allocation6], %s29
      %s31 = sshll.u32 [#allocation5], 4
      %s32 = int_to_ptr.vmem [resolvable:$true] %s31
      %37 = dma.hbm_to_vmem [thread:$0]  %s1, 512, %s32, [#allocation6], 128, 128, 8
    $region9: #{scaled_dot_product_attention.1} parent=1 // pred_fallthru
      _
    // Predicated region
    $region10: #{scaled_dot_product_attention.1} parent=1 // pred_check
      _
    $region11: #{scaled_dot_product_attention.1} parent=1 // pred_check_branch
      %39 = sbr.rel (0) target = $region13
    $region12: #{scaled_dot_product_attention.1} parent=1 // pred_region
      %s41 = ssub.s32 512, 512
      %42 = vsyncadd [#allocation6], %s41
      %s43 = sshll.u32 [#allocation7], 4
      %s44 = int_to_ptr.vmem [resolvable:$true] %s43
      %49 = dma.hbm_to_vmem [thread:$0]  %s2, 512, %s44, [#allocation6], 128, 128, 8
    $region13: #{scaled_dot_product_attention.1} parent=1 // pred_fallthru
      _
    // Predicated region
    $region14: #{scaled_dot_product_attention.1} parent=1 // pred_check
      _
    $region15: #{scaled_dot_product_attention.1} parent=1 // pred_check_branch
      %51 = sbr.rel (0) target = $region17
    $region16: #{scaled_dot_product_attention.1} parent=1 // pred_region
      %52 = dma.done [#allocation3], 512
    $region17: #{scaled_dot_product_attention.1} parent=1 // pred_fallthru
      _
    // Predicated region
    $region18: #{scaled_dot_product_attention.1} parent=1 // pred_check
      _
    $region19: #{scaled_dot_product_attention.1} parent=1 // pred_check_branch
      %54 = sbr.rel (0) target = $region21
    $region20: #{scaled_dot_product_attention.1} parent=1 // pred_region
      %55 = dma.done [#allocation6], 512
    $region21: #{scaled_dot_product_attention.1} parent=1 // pred_fallthru
      _
    // Predicated region
    $region22: #{scaled_dot_product_attention.1} parent=1 // pred_check
      _
    $region23: #{scaled_dot_product_attention.1} parent=1 // pred_check_branch
      %57 = sbr.rel (0) target = $region25
    $region24: #{scaled_dot_product_attention.1} parent=1 // pred_region
      %58 = dma.done [#allocation6], 512
    $region25: #{scaled_dot_product_attention.1} parent=1 // pred_fallthru
      _
    %v59 = vld [vmem:[#allocation2] sm:$0xff]
    %v60 = vld [vmem:[#allocation2 + $0x8] sm:$0xff]
    %v61 = vld [vmem:[#allocation2 + $0x10] sm:$0xff]
    %v62 = vld [vmem:[#allocation2 + $0x18] sm:$0xff]
    %v63 = vld [vmem:[#allocation5] sm:$0xff]
    %v64 = vld [vmem:[#allocation5 + $0x8] sm:$0xff]
    %v65 = vld [vmem:[#allocation5 + $0x10] sm:$0xff]
    %v66 = vld [vmem:[#allocation5 + $0x18] sm:$0xff]
    %v67 = vld [vmem:[#allocation7] sm:$0xff]
    %v68 = vld [vmem:[#allocation7 + $0x8] sm:$0xff]
    %v69 = vld [vmem:[#allocation7 + $0x10] sm:$0xff]
    %v70 = vld [vmem:[#allocation7 + $0x18] sm:$0xff]
    %v71 = vmul.f32 %v59, 0.25
    %v72 = vmul.f32 %v60, 0.25
    %v73 = vmul.f32 %v61, 0.25
    %v74 = vmul.f32 %v62, 0.25
    %vm75 = vcmask 130048
    %v77 = vsel %vm75, %v71, 0
    %v80 = vsel %vm75, %v63, 0
    %82 = vmatprep.subr.mxu0 0.0
    %83 = vmatpush1.xpose.msra.mxu0 %v80
    %84 = vmatprep.subr.mxu0 0.0
    %85 = vmatpush1.xpose.msra.mxu0 0.0
    %86 = vmatprep.subr.mxu0 0.0
    %87 = vmatpush1.xpose.msra.mxu0 0.0
    %88 = vmatprep.subr.mxu0 0.0
    %89 = vmatpush1.xpose.msra.mxu0 0.0
    %90 = vmatprep.subr.mxu0 0.0
    %91 = vmatpush1.xpose.msra.mxu0 0.0
    %92 = vmatprep.subr.mxu0 0.0
    %93 = vmatpush1.xpose.msra.mxu0 0.0
    %94 = vmatprep.subr.mxu0 0.0
    %95 = vmatpush1.xpose.msra.mxu0 0.0
    %96 = vmatprep.subr.mxu0 0.0
    %97 = vmatpush1.xpose.msra.mxu0 0.0
    %98 = vmatprep.subr.mxu0 0.0
    %99 = vmatpush1.xpose.msra.mxu0 0.0
    %100 = vmatprep.subr.mxu0 0.0
    %101 = vmatpush1.xpose.msra.mxu0 0.0
    %102 = vmatprep.subr.mxu0 0.0
    %103 = vmatpush1.xpose.msra.mxu0 0.0
    %104 = vmatprep.subr.mxu0 0.0
    %105 = vmatpush1.xpose.msra.mxu0 0.0
    %106 = vmatprep.subr.mxu0 0.0
    %107 = vmatpush1.xpose.msra.mxu0 0.0
    %108 = vmatprep.subr.mxu0 0.0
    %109 = vmatpush1.xpose.msra.mxu0 0.0
    %110 = vmatprep.subr.mxu0 0.0
    %111 = vmatpush1.xpose.msra.mxu0 0.0
    %112 = vmatprep.subr.mxu0 0.0
    %113 = vmatpush1.xpose.msra.mxu0 0.0
    %114 = vmatprep.subr.mxu0 0.0
    %115 = vmatpush1.xpose.msra.mxu0 0.0
    %116 = vmatprep.subr.mxu0 0.0
    %117 = vmatpush1.xpose.msra.mxu0 0.0
    %118 = vmatprep.subr.mxu0 0.0
    %119 = vmatpush1.xpose.msra.mxu0 0.0
    %120 = vmatprep.subr.mxu0 0.0
    %121 = vmatpush1.xpose.msra.mxu0 0.0
    %122 = vmatprep.subr.mxu0 0.0
    %123 = vmatpush1.xpose.msra.mxu0 0.0
    %124 = vmatprep.subr.mxu0 0.0
    %125 = vmatpush1.xpose.msra.mxu0 0.0
    %126 = vmatprep.subr.mxu0 0.0
    %127 = vmatpush1.xpose.msra.mxu0 0.0
    %128 = vmatprep.subr.mxu0 0.0
    %129 = vmatpush1.xpose.msra.mxu0 0.0
    %130 = vmatprep.subr.mxu0 0.0
    %131 = vmatpush1.xpose.msra.mxu0 0.0
    %132 = vmatprep.subr.mxu0 0.0
    %133 = vmatpush1.xpose.msra.mxu0 0.0
    %134 = vmatprep.subr.mxu0 0.0
    %135 = vmatpush1.xpose.msra.mxu0 0.0
    %136 = vmatprep.subr.mxu0 0.0
    %137 = vmatpush1.xpose.msra.mxu0 0.0
    %138 = vmatprep.subr.mxu0 0.0
    %139 = vmatpush1.xpose.msra.mxu0 0.0
    %140 = vmatprep.subr.mxu0 0.0
    %141 = vmatpush1.xpose.msra.mxu0 0.0
    %142 = vmatprep.subr.mxu0 0.0
    %143 = vmatpush1.xpose.msra.mxu0 0.0
    %144 = vmatprep.subr.mxu0 0.0
    %145 = vmatpush1.xpose.msra.mxu0 0.0
    %146 = vmatprep.mubr.f32.mxu0 0.0
    %147 = vmatmul.mubr.f32.gmra.mrb[0].mxu0 %v77
    %v148 = vpop.f32.mrb[0].mxu0
    %v149 = vadd.f32 0.0, %v148
    %v150 = vpop.f32.mrb[0].mxu0
    %151 = vdwg.mxu0
    %v153 = vsel %vm75, %v72, 0
    %v156 = vsel %vm75, %v64, 0
    %158 = vmatprep.subr.mxu0 0.0
    %159 = vmatpush1.xpose.msra.mxu0 %v156
    %160 = vmatprep.subr.mxu0 0.0
    %161 = vmatpush1.xpose.msra.mxu0 0.0
    %162 = vmatprep.subr.mxu0 0.0
    %163 = vmatpush1.xpose.msra.mxu0 0.0
    %164 = vmatprep.subr.mxu0 0.0
    %165 = vmatpush1.xpose.msra.mxu0 0.0
    %166 = vmatprep.subr.mxu0 0.0
    %167 = vmatpush1.xpose.msra.mxu0 0.0
    %168 = vmatprep.subr.mxu0 0.0
    %169 = vmatpush1.xpose.msra.mxu0 0.0
    %170 = vmatprep.subr.mxu0 0.0
    %171 = vmatpush1.xpose.msra.mxu0 0.0
    %172 = vmatprep.subr.mxu0 0.0
    %173 = vmatpush1.xpose.msra.mxu0 0.0
    %174 = vmatprep.subr.mxu0 0.0
    %175 = vmatpush1.xpose.msra.mxu0 0.0
    %176 = vmatprep.subr.mxu0 0.0
    %177 = vmatpush1.xpose.msra.mxu0 0.0
    %178 = vmatprep.subr.mxu0 0.0
    %179 = vmatpush1.xpose.msra.mxu0 0.0
    %180 = vmatprep.subr.mxu0 0.0
    %181 = vmatpush1.xpose.msra.mxu0 0.0
    %182 = vmatprep.subr.mxu0 0.0
    %183 = vmatpush1.xpose.msra.mxu0 0.0
    %184 = vmatprep.subr.mxu0 0.0
    %185 = vmatpush1.xpose.msra.mxu0 0.0
    %186 = vmatprep.subr.mxu0 0.0
    %187 = vmatpush1.xpose.msra.mxu0 0.0
    %188 = vmatprep.subr.mxu0 0.0
    %189 = vmatpush1.xpose.msra.mxu0 0.0
    %190 = vmatprep.subr.mxu0 0.0
    %191 = vmatpush1.xpose.msra.mxu0 0.0
    %192 = vmatprep.subr.mxu0 0.0
    %193 = vmatpush1.xpose.msra.mxu0 0.0
    %194 = vmatprep.subr.mxu0 0.0
    %195 = vmatpush1.xpose.msra.mxu0 0.0
    %196 = vmatprep.subr.mxu0 0.0
    %197 = vmatpush1.xpose.msra.mxu0 0.0
    %198 = vmatprep.subr.mxu0 0.0
    %199 = vmatpush1.xpose.msra.mxu0 0.0
    %200 = vmatprep.subr.mxu0 0.0
    %201 = vmatpush1.xpose.msra.mxu0 0.0
    %202 = vmatprep.subr.mxu0 0.0
    %203 = vmatpush1.xpose.msra.mxu0 0.0
    %204 = vmatprep.subr.mxu0 0.0
    %205 = vmatpush1.xpose.msra.mxu0 0.0
    %206 = vmatprep.subr.mxu0 0.0
    %207 = vmatpush1.xpose.msra.mxu0 0.0
    %208 = vmatprep.subr.mxu0 0.0
    %209 = vmatpush1.xpose.msra.mxu0 0.0
    %210 = vmatprep.subr.mxu0 0.0
    %211 = vmatpush1.xpose.msra.mxu0 0.0
    %212 = vmatprep.subr.mxu0 0.0
    %213 = vmatpush1.xpose.msra.mxu0 0.0
    %214 = vmatprep.subr.mxu0 0.0
    %215 = vmatpush1.xpose.msra.mxu0 0.0
    %216 = vmatprep.subr.mxu0 0.0
    %217 = vmatpush1.xpose.msra.mxu0 0.0
    %218 = vmatprep.subr.mxu0 0.0
    %219 = vmatpush1.xpose.msra.mxu0 0.0
    %220 = vmatprep.subr.mxu0 0.0
    %221 = vmatpush1.xpose.msra.mxu0 0.0
    %222 = vmatprep.mubr.f32.mxu0 0.0
    %223 = vmatmul.mubr.f32.gmra.mrb[0].mxu0 %v153
    %v224 = vpop.f32.mrb[0].mxu0
    %v225 = vadd.f32 0.0, %v224
    %v226 = vpop.f32.mrb[0].mxu0
    %227 = vdwg.mxu0
    %v229 = vsel %vm75, %v73, 0
    %v232 = vsel %vm75, %v65, 0
    %234 = vmatprep.subr.mxu0 0.0
    %235 = vmatpush1.xpose.msra.mxu0 %v232
    %236 = vmatprep.subr.mxu0 0.0
    %237 = vmatpush1.xpose.msra.mxu0 0.0
    %238 = vmatprep.subr.mxu0 0.0
    %239 = vmatpush1.xpose.msra.mxu0 0.0
    %240 = vmatprep.subr.mxu0 0.0
    %241 = vmatpush1.xpose.msra.mxu0 0.0
    %242 = vmatprep.subr.mxu0 0.0
    %243 = vmatpush1.xpose.msra.mxu0 0.0
    %244 = vmatprep.subr.mxu0 0.0
    %245 = vmatpush1.xpose.msra.mxu0 0.0
    %246 = vmatprep.subr.mxu0 0.0
    %247 = vmatpush1.xpose.msra.mxu0 0.0
    %248 = vmatprep.subr.mxu0 0.0
    %249 = vmatpush1.xpose.msra.mxu0 0.0
    %250 = vmatprep.subr.mxu0 0.0
    %251 = vmatpush1.xpose.msra.mxu0 0.0
    %252 = vmatprep.subr.mxu0 0.0
    %253 = vmatpush1.xpose.msra.mxu0 0.0
    %254 = vmatprep.subr.mxu0 0.0
    %255 = vmatpush1.xpose.msra.mxu0 0.0
    %256 = vmatprep.subr.mxu0 0.0
    %257 = vmatpush1.xpose.msra.mxu0 0.0
    %258 = vmatprep.subr.mxu0 0.0
    %259 = vmatpush1.xpose.msra.mxu0 0.0
    %260 = vmatprep.subr.mxu0 0.0
    %261 = vmatpush1.xpose.msra.mxu0 0.0
    %262 = vmatprep.subr.mxu0 0.0
    %263 = vmatpush1.xpose.msra.mxu0 0.0
    %264 = vmatprep.subr.mxu0 0.0
    %265 = vmatpush1.xpose.msra.mxu0 0.0
    %266 = vmatprep.subr.mxu0 0.0
    %267 = vmatpush1.xpose.msra.mxu0 0.0
    %268 = vmatprep.subr.mxu0 0.0
    %269 = vmatpush1.xpose.msra.mxu0 0.0
    %270 = vmatprep.subr.mxu0 0.0
    %271 = vmatpush1.xpose.msra.mxu0 0.0
    %272 = vmatprep.subr.mxu0 0.0
    %273 = vmatpush1.xpose.msra.mxu0 0.0
    %274 = vmatprep.subr.mxu0 0.0
    %275 = vmatpush1.xpose.msra.mxu0 0.0
    %276 = vmatprep.subr.mxu0 0.0
    %277 = vmatpush1.xpose.msra.mxu0 0.0
    %278 = vmatprep.subr.mxu0 0.0
    %279 = vmatpush1.xpose.msra.mxu0 0.0
    %280 = vmatprep.subr.mxu0 0.0
    %281 = vmatpush1.xpose.msra.mxu0 0.0
    %282 = vmatprep.subr.mxu0 0.0
    %283 = vmatpush1.xpose.msra.mxu0 0.0
    %284 = vmatprep.subr.mxu0 0.0
    %285 = vmatpush1.xpose.msra.mxu0 0.0
    %286 = vmatprep.subr.mxu0 0.0
    %287 = vmatpush1.xpose.msra.mxu0 0.0
    %288 = vmatprep.subr.mxu0 0.0
    %289 = vmatpush1.xpose.msra.mxu0 0.0
    %290 = vmatprep.subr.mxu0 0.0
    %291 = vmatpush1.xpose.msra.mxu0 0.0
    %292 = vmatprep.subr.mxu0 0.0
    %293 = vmatpush1.xpose.msra.mxu0 0.0
    %294 = vmatprep.subr.mxu0 0.0
    %295 = vmatpush1.xpose.msra.mxu0 0.0
    %296 = vmatprep.subr.mxu0 0.0
    %297 = vmatpush1.xpose.msra.mxu0 0.0
    %298 = vmatprep.mubr.f32.mxu0 0.0
    %299 = vmatmul.mubr.f32.gmra.mrb[0].mxu0 %v229
    %v300 = vpop.f32.mrb[0].mxu0
    %v301 = vadd.f32 0.0, %v300
    %v302 = vpop.f32.mrb[0].mxu0
    %303 = vdwg.mxu0
    %v305 = vsel %vm75, %v74, 0
    %v308 = vsel %vm75, %v66, 0
    %310 = vmatprep.subr.mxu0 0.0
    %311 = vmatpush1.xpose.msra.mxu0 %v308
    %312 = vmatprep.subr.mxu0 0.0
    %313 = vmatpush1.xpose.msra.mxu0 0.0
    %314 = vmatprep.subr.mxu0 0.0
    %315 = vmatpush1.xpose.msra.mxu0 0.0
    %316 = vmatprep.subr.mxu0 0.0
    %317 = vmatpush1.xpose.msra.mxu0 0.0
    %318 = vmatprep.subr.mxu0 0.0
    %319 = vmatpush1.xpose.msra.mxu0 0.0
    %320 = vmatprep.subr.mxu0 0.0
    %321 = vmatpush1.xpose.msra.mxu0 0.0
    %322 = vmatprep.subr.mxu0 0.0
    %323 = vmatpush1.xpose.msra.mxu0 0.0
    %324 = vmatprep.subr.mxu0 0.0
    %325 = vmatpush1.xpose.msra.mxu0 0.0
    %326 = vmatprep.subr.mxu0 0.0
    %327 = vmatpush1.xpose.msra.mxu0 0.0
    %328 = vmatprep.subr.mxu0 0.0
    %329 = vmatpush1.xpose.msra.mxu0 0.0
    %330 = vmatprep.subr.mxu0 0.0
    %331 = vmatpush1.xpose.msra.mxu0 0.0
    %332 = vmatprep.subr.mxu0 0.0
    %333 = vmatpush1.xpose.msra.mxu0 0.0
    %334 = vmatprep.subr.mxu0 0.0
    %335 = vmatpush1.xpose.msra.mxu0 0.0
    %336 = vmatprep.subr.mxu0 0.0
    %337 = vmatpush1.xpose.msra.mxu0 0.0
    %338 = vmatprep.subr.mxu0 0.0
    %339 = vmatpush1.xpose.msra.mxu0 0.0
    %340 = vmatprep.subr.mxu0 0.0
    %341 = vmatpush1.xpose.msra.mxu0 0.0
    %342 = vmatprep.subr.mxu0 0.0
    %343 = vmatpush1.xpose.msra.mxu0 0.0
    %344 = vmatprep.subr.mxu0 0.0
    %345 = vmatpush1.xpose.msra.mxu0 0.0
    %346 = vmatprep.subr.mxu0 0.0
    %347 = vmatpush1.xpose.msra.mxu0 0.0
    %348 = vmatprep.subr.mxu0 0.0
    %349 = vmatpush1.xpose.msra.mxu0 0.0
    %350 = vmatprep.subr.mxu0 0.0
    %351 = vmatpush1.xpose.msra.mxu0 0.0
    %352 = vmatprep.subr.mxu0 0.0
    %353 = vmatpush1.xpose.msra.mxu0 0.0
    %354 = vmatprep.subr.mxu0 0.0
    %355 = vmatpush1.xpose.msra.mxu0 0.0
    %356 = vmatprep.subr.mxu0 0.0
    %357 = vmatpush1.xpose.msra.mxu0 0.0
    %358 = vmatprep.subr.mxu0 0.0
    %359 = vmatpush1.xpose.msra.mxu0 0.0
    %360 = vmatprep.subr.mxu0 0.0
    %361 = vmatpush1.xpose.msra.mxu0 0.0
    %362 = vmatprep.subr.mxu0 0.0
    %363 = vmatpush1.xpose.msra.mxu0 0.0
    %364 = vmatprep.subr.mxu0 0.0
    %365 = vmatpush1.xpose.msra.mxu0 0.0
    %366 = vmatprep.subr.mxu0 0.0
    %367 = vmatpush1.xpose.msra.mxu0 0.0
    %368 = vmatprep.subr.mxu0 0.0
    %369 = vmatpush1.xpose.msra.mxu0 0.0
    %370 = vmatprep.subr.mxu0 0.0
    %371 = vmatpush1.xpose.msra.mxu0 0.0
    %372 = vmatprep.subr.mxu0 0.0
    %373 = vmatpush1.xpose.msra.mxu0 0.0
    %374 = vmatprep.mubr.f32.mxu0 0.0
    %375 = vmatmul.mubr.f32.gmra.mrb[0].mxu0 %v305
    %v376 = vpop.f32.mrb[0].mxu0
    %v377 = vadd.f32 0.0, %v376
    %v378 = vpop.f32.mrb[0].mxu0
    %379 = vdwg.mxu0
    %vm380 = vcmask 64512
    %v381 = vsel %vm380, %v149, -inf
    %382 = vmax.xlane.f32.xlu0 %v381
    %v383 = vpop.xlane.xlu0 %382
    %v384 = vsel %vm380, %v225, -inf
    %385 = vmax.xlane.f32.xlu0 %v384
    %v386 = vpop.xlane.xlu0 %385
    %v387 = vsel %vm380, %v301, -inf
    %388 = vmax.xlane.f32.xlu0 %v387
    %v389 = vpop.xlane.xlu0 %388
    %v390 = vsel %vm380, %v377, -inf
    %391 = vmax.xlane.f32.xlu0 %v390
    %v392 = vpop.xlane.xlu0 %391
    %v393 = vsub.f32 %v149, %v383
    %v394 = vsub.f32 %v225, %v386
    %v395 = vsub.f32 %v301, %v389
    %v396 = vsub.f32 %v377, %v392
    %v397 = vmul.f32 %v393, 1.442695
    %v398 = vpow.pop %v397
    %v399 = vmul.f32 %v394, 1.442695
    %v400 = vpow.pop %v399
    %v401 = vmul.f32 %v395, 1.442695
    %v402 = vpow.pop %v401
    %v403 = vmul.f32 %v396, 1.442695
    %v404 = vpow.pop %v403
    %v405 = vsel %vm380, %v398, 0.0
    %406 = vadd.xlane.f32.xlu0 %v405
    %v407 = vpop.xlane.xlu0 %406
    %v408 = vsel %vm380, %v400, 0.0
    %409 = vadd.xlane.f32.xlu0 %v408
    %v410 = vpop.xlane.xlu0 %409
    %v411 = vsel %vm380, %v402, 0.0
    %412 = vadd.xlane.f32.xlu0 %v411
    %v413 = vpop.xlane.xlu0 %412
    %v414 = vsel %vm380, %v404, 0.0
    %415 = vadd.xlane.f32.xlu0 %v414
    %v416 = vpop.xlane.xlu0 %415
    %v417 = vrcp.pop %v407
    %v418 = vrcp.pop %v410
    %v419 = vrcp.pop %v413
    %v420 = vrcp.pop %v416
    %v421 = vmul.f32 %v398, %v417
    %v422 = vmul.f32 %v400, %v418
    %v423 = vmul.f32 %v402, %v419
    %v424 = vmul.f32 %v404, %v420
    %v426 = vsel %vm380, %v421, 0
    %428 = vmatprep.subr.mxu0 0.0
    %429 = vmatpush1.msra.mxu0 %v67
    %430 = vmatprep.subr.mxu0 0.0
    %431 = vmatpush1.msra.mxu0 0.0
    %432 = vmatprep.subr.mxu0 0.0
    %433 = vmatpush1.msra.mxu0 0.0
    %434 = vmatprep.subr.mxu0 0.0
    %435 = vmatpush1.msra.mxu0 0.0
    %436 = vmatprep.subr.mxu0 0.0
    %437 = vmatpush1.msra.mxu0 0.0
    %438 = vmatprep.subr.mxu0 0.0
    %439 = vmatpush1.msra.mxu0 0.0
    %440 = vmatprep.subr.mxu0 0.0
    %441 = vmatpush1.msra.mxu0 0.0
    %442 = vmatprep.subr.mxu0 0.0
    %443 = vmatpush1.msra.mxu0 0.0
    %444 = vmatprep.subr.mxu0 0.0
    %445 = vmatpush1.msra.mxu0 0.0
    %446 = vmatprep.subr.mxu0 0.0
    %447 = vmatpush1.msra.mxu0 0.0
    %448 = vmatprep.subr.mxu0 0.0
    %449 = vmatpush1.msra.mxu0 0.0
    %450 = vmatprep.subr.mxu0 0.0
    %451 = vmatpush1.msra.mxu0 0.0
    %452 = vmatprep.subr.mxu0 0.0
    %453 = vmatpush1.msra.mxu0 0.0
    %454 = vmatprep.subr.mxu0 0.0
    %455 = vmatpush1.msra.mxu0 0.0
    %456 = vmatprep.subr.mxu0 0.0
    %457 = vmatpush1.msra.mxu0 0.0
    %458 = vmatprep.subr.mxu0 0.0
    %459 = vmatpush1.msra.mxu0 0.0
    %460 = vmatprep.subr.mxu0 0.0
    %461 = vmatpush1.msra.mxu0 0.0
    %462 = vmatprep.subr.mxu0 0.0
    %463 = vmatpush1.msra.mxu0 0.0
    %464 = vmatprep.subr.mxu0 0.0
    %465 = vmatpush1.msra.mxu0 0.0
    %466 = vmatprep.subr.mxu0 0.0
    %467 = vmatpush1.msra.mxu0 0.0
    %468 = vmatprep.subr.mxu0 0.0
    %469 = vmatpush1.msra.mxu0 0.0
    %470 = vmatprep.subr.mxu0 0.0
    %471 = vmatpush1.msra.mxu0 0.0
    %472 = vmatprep.subr.mxu0 0.0
    %473 = vmatpush1.msra.mxu0 0.0
    %474 = vmatprep.subr.mxu0 0.0
    %475 = vmatpush1.msra.mxu0 0.0
    %476 = vmatprep.subr.mxu0 0.0
    %477 = vmatpush1.msra.mxu0 0.0
    %478 = vmatprep.subr.mxu0 0.0
    %479 = vmatpush1.msra.mxu0 0.0
    %480 = vmatprep.subr.mxu0 0.0
    %481 = vmatpush1.msra.mxu0 0.0
    %482 = vmatprep.subr.mxu0 0.0
    %483 = vmatpush1.msra.mxu0 0.0
    %484 = vmatprep.subr.mxu0 0.0
    %485 = vmatpush1.msra.mxu0 0.0
    %486 = vmatprep.subr.mxu0 0.0
    %487 = vmatpush1.msra.mxu0 0.0
    %488 = vmatprep.subr.mxu0 0.0
    %489 = vmatpush1.msra.mxu0 0.0
    %490 = vmatprep.subr.mxu0 0.0
    %491 = vmatpush1.msra.mxu0 0.0
    %492 = vmatprep.mubr.f32.mxu0 0.0
    %493 = vmatmul.mubr.f32.gmra.mrb[0].mxu0 %v426
    %v494 = vpop.f32.mrb[0].mxu0
    %v495 = vadd.f32 0.0, %v494
    %v496 = vpop.f32.mrb[0].mxu0
    %497 = vdwg.mxu0
    %v499 = vsel %vm380, %v422, 0
    %501 = vmatprep.subr.mxu0 0.0
    %502 = vmatpush1.msra.mxu0 %v68
    %503 = vmatprep.subr.mxu0 0.0
    %504 = vmatpush1.msra.mxu0 0.0
    %505 = vmatprep.subr.mxu0 0.0
    %506 = vmatpush1.msra.mxu0 0.0
    %507 = vmatprep.subr.mxu0 0.0
    %508 = vmatpush1.msra.mxu0 0.0
    %509 = vmatprep.subr.mxu0 0.0
    %510 = vmatpush1.msra.mxu0 0.0
    %511 = vmatprep.subr.mxu0 0.0
    %512 = vmatpush1.msra.mxu0 0.0
    %513 = vmatprep.subr.mxu0 0.0
    %514 = vmatpush1.msra.mxu0 0.0
    %515 = vmatprep.subr.mxu0 0.0
    %516 = vmatpush1.msra.mxu0 0.0
    %517 = vmatprep.subr.mxu0 0.0
    %518 = vmatpush1.msra.mxu0 0.0
    %519 = vmatprep.subr.mxu0 0.0
    %520 = vmatpush1.msra.mxu0 0.0
    %521 = vmatprep.subr.mxu0 0.0
    %522 = vmatpush1.msra.mxu0 0.0
    %523 = vmatprep.subr.mxu0 0.0
    %524 = vmatpush1.msra.mxu0 0.0
    %525 = vmatprep.subr.mxu0 0.0
    %526 = vmatpush1.msra.mxu0 0.0
    %527 = vmatprep.subr.mxu0 0.0
    %528 = vmatpush1.msra.mxu0 0.0
    %529 = vmatprep.subr.mxu0 0.0
    %530 = vmatpush1.msra.mxu0 0.0
    %531 = vmatprep.subr.mxu0 0.0
    %532 = vmatpush1.msra.mxu0 0.0
    %533 = vmatprep.subr.mxu0 0.0
    %534 = vmatpush1.msra.mxu0 0.0
    %535 = vmatprep.subr.mxu0 0.0
    %536 = vmatpush1.msra.mxu0 0.0
    %537 = vmatprep.subr.mxu0 0.0
    %538 = vmatpush1.msra.mxu0 0.0
    %539 = vmatprep.subr.mxu0 0.0
    %540 = vmatpush1.msra.mxu0 0.0
    %541 = vmatprep.subr.mxu0 0.0
    %542 = vmatpush1.msra.mxu0 0.0
    %543 = vmatprep.subr.mxu0 0.0
    %544 = vmatpush1.msra.mxu0 0.0
    %545 = vmatprep.subr.mxu0 0.0
    %546 = vmatpush1.msra.mxu0 0.0
    %547 = vmatprep.subr.mxu0 0.0
    %548 = vmatpush1.msra.mxu0 0.0
    %549 = vmatprep.subr.mxu0 0.0
    %550 = vmatpush1.msra.mxu0 0.0
    %551 = vmatprep.subr.mxu0 0.0
    %552 = vmatpush1.msra.mxu0 0.0
    %553 = vmatprep.subr.mxu0 0.0
    %554 = vmatpush1.msra.mxu0 0.0
    %555 = vmatprep.subr.mxu0 0.0
    %556 = vmatpush1.msra.mxu0 0.0
    %557 = vmatprep.subr.mxu0 0.0
    %558 = vmatpush1.msra.mxu0 0.0
    %559 = vmatprep.subr.mxu0 0.0
    %560 = vmatpush1.msra.mxu0 0.0
    %561 = vmatprep.subr.mxu0 0.0
    %562 = vmatpush1.msra.mxu0 0.0
    %563 = vmatprep.subr.mxu0 0.0
    %564 = vmatpush1.msra.mxu0 0.0
    %565 = vmatprep.mubr.f32.mxu0 0.0
    %566 = vmatmul.mubr.f32.gmra.mrb[0].mxu0 %v499
    %v567 = vpop.f32.mrb[0].mxu0
    %v568 = vadd.f32 0.0, %v567
    %v569 = vpop.f32.mrb[0].mxu0
    %570 = vdwg.mxu0
    %v572 = vsel %vm380, %v423, 0
    %574 = vmatprep.subr.mxu0 0.0
    %575 = vmatpush1.msra.mxu0 %v69
    %576 = vmatprep.subr.mxu0 0.0
    %577 = vmatpush1.msra.mxu0 0.0
    %578 = vmatprep.subr.mxu0 0.0
    %579 = vmatpush1.msra.mxu0 0.0
    %580 = vmatprep.subr.mxu0 0.0
    %581 = vmatpush1.msra.mxu0 0.0
    %582 = vmatprep.subr.mxu0 0.0
    %583 = vmatpush1.msra.mxu0 0.0
    %584 = vmatprep.subr.mxu0 0.0
    %585 = vmatpush1.msra.mxu0 0.0
    %586 = vmatprep.subr.mxu0 0.0
    %587 = vmatpush1.msra.mxu0 0.0
    %588 = vmatprep.subr.mxu0 0.0
    %589 = vmatpush1.msra.mxu0 0.0
    %590 = vmatprep.subr.mxu0 0.0
    %591 = vmatpush1.msra.mxu0 0.0
    %592 = vmatprep.subr.mxu0 0.0
    %593 = vmatpush1.msra.mxu0 0.0
    %594 = vmatprep.subr.mxu0 0.0
    %595 = vmatpush1.msra.mxu0 0.0
    %596 = vmatprep.subr.mxu0 0.0
    %597 = vmatpush1.msra.mxu0 0.0
    %598 = vmatprep.subr.mxu0 0.0
    %599 = vmatpush1.msra.mxu0 0.0
    %600 = vmatprep.subr.mxu0 0.0
    %601 = vmatpush1.msra.mxu0 0.0
    %602 = vmatprep.subr.mxu0 0.0
    %603 = vmatpush1.msra.mxu0 0.0
    %604 = vmatprep.subr.mxu0 0.0
    %605 = vmatpush1.msra.mxu0 0.0
    %606 = vmatprep.subr.mxu0 0.0
    %607 = vmatpush1.msra.mxu0 0.0
    %608 = vmatprep.subr.mxu0 0.0
    %609 = vmatpush1.msra.mxu0 0.0
    %610 = vmatprep.subr.mxu0 0.0
    %611 = vmatpush1.msra.mxu0 0.0
    %612 = vmatprep.subr.mxu0 0.0
    %613 = vmatpush1.msra.mxu0 0.0
    %614 = vmatprep.subr.mxu0 0.0
    %615 = vmatpush1.msra.mxu0 0.0
    %616 = vmatprep.subr.mxu0 0.0
    %617 = vmatpush1.msra.mxu0 0.0
    %618 = vmatprep.subr.mxu0 0.0
    %619 = vmatpush1.msra.mxu0 0.0
    %620 = vmatprep.subr.mxu0 0.0
    %621 = vmatpush1.msra.mxu0 0.0
    %622 = vmatprep.subr.mxu0 0.0
    %623 = vmatpush1.msra.mxu0 0.0
    %624 = vmatprep.subr.mxu0 0.0
    %625 = vmatpush1.msra.mxu0 0.0
    %626 = vmatprep.subr.mxu0 0.0
    %627 = vmatpush1.msra.mxu0 0.0
    %628 = vmatprep.subr.mxu0 0.0
    %629 = vmatpush1.msra.mxu0 0.0
    %630 = vmatprep.subr.mxu0 0.0
    %631 = vmatpush1.msra.mxu0 0.0
    %632 = vmatprep.subr.mxu0 0.0
    %633 = vmatpush1.msra.mxu0 0.0
    %634 = vmatprep.subr.mxu0 0.0
    %635 = vmatpush1.msra.mxu0 0.0
    %636 = vmatprep.subr.mxu0 0.0
    %637 = vmatpush1.msra.mxu0 0.0
    %638 = vmatprep.mubr.f32.mxu0 0.0
    %639 = vmatmul.mubr.f32.gmra.mrb[0].mxu0 %v572
    %v640 = vpop.f32.mrb[0].mxu0
    %v641 = vadd.f32 0.0, %v640
    %v642 = vpop.f32.mrb[0].mxu0
    %643 = vdwg.mxu0
    %v645 = vsel %vm380, %v424, 0
    %647 = vmatprep.subr.mxu0 0.0
    %648 = vmatpush1.msra.mxu0 %v70
    %649 = vmatprep.subr.mxu0 0.0
    %650 = vmatpush1.msra.mxu0 0.0
    %651 = vmatprep.subr.mxu0 0.0
    %652 = vmatpush1.msra.mxu0 0.0
    %653 = vmatprep.subr.mxu0 0.0
    %654 = vmatpush1.msra.mxu0 0.0
    %655 = vmatprep.subr.mxu0 0.0
    %656 = vmatpush1.msra.mxu0 0.0
    %657 = vmatprep.subr.mxu0 0.0
    %658 = vmatpush1.msra.mxu0 0.0
    %659 = vmatprep.subr.mxu0 0.0
    %660 = vmatpush1.msra.mxu0 0.0
    %661 = vmatprep.subr.mxu0 0.0
    %662 = vmatpush1.msra.mxu0 0.0
    %663 = vmatprep.subr.mxu0 0.0
    %664 = vmatpush1.msra.mxu0 0.0
    %665 = vmatprep.subr.mxu0 0.0
    %666 = vmatpush1.msra.mxu0 0.0
    %667 = vmatprep.subr.mxu0 0.0
    %668 = vmatpush1.msra.mxu0 0.0
    %669 = vmatprep.subr.mxu0 0.0
    %670 = vmatpush1.msra.mxu0 0.0
    %671 = vmatprep.subr.mxu0 0.0
    %672 = vmatpush1.msra.mxu0 0.0
    %673 = vmatprep.subr.mxu0 0.0
    %674 = vmatpush1.msra.mxu0 0.0
    %675 = vmatprep.subr.mxu0 0.0
    %676 = vmatpush1.msra.mxu0 0.0
    %677 = vmatprep.subr.mxu0 0.0
    %678 = vmatpush1.msra.mxu0 0.0
    %679 = vmatprep.subr.mxu0 0.0
    %680 = vmatpush1.msra.mxu0 0.0
    %681 = vmatprep.subr.mxu0 0.0
    %682 = vmatpush1.msra.mxu0 0.0
    %683 = vmatprep.subr.mxu0 0.0
    %684 = vmatpush1.msra.mxu0 0.0
    %685 = vmatprep.subr.mxu0 0.0
    %686 = vmatpush1.msra.mxu0 0.0
    %687 = vmatprep.subr.mxu0 0.0
    %688 = vmatpush1.msra.mxu0 0.0
    %689 = vmatprep.subr.mxu0 0.0
    %690 = vmatpush1.msra.mxu0 0.0
    %691 = vmatprep.subr.mxu0 0.0
    %692 = vmatpush1.msra.mxu0 0.0
    %693 = vmatprep.subr.mxu0 0.0
    %694 = vmatpush1.msra.mxu0 0.0
    %695 = vmatprep.subr.mxu0 0.0
    %696 = vmatpush1.msra.mxu0 0.0
    %697 = vmatprep.subr.mxu0 0.0
    %698 = vmatpush1.msra.mxu0 0.0
    %699 = vmatprep.subr.mxu0 0.0
    %700 = vmatpush1.msra.mxu0 0.0
    %701 = vmatprep.subr.mxu0 0.0
    %702 = vmatpush1.msra.mxu0 0.0
    %703 = vmatprep.subr.mxu0 0.0
    %704 = vmatpush1.msra.mxu0 0.0
    %705 = vmatprep.subr.mxu0 0.0
    %706 = vmatpush1.msra.mxu0 0.0
    %707 = vmatprep.subr.mxu0 0.0
    %708 = vmatpush1.msra.mxu0 0.0
    %709 = vmatprep.subr.mxu0 0.0
    %710 = vmatpush1.msra.mxu0 0.0
    %711 = vmatprep.mubr.f32.mxu0 0.0
    %712 = vmatmul.mubr.f32.gmra.mrb[0].mxu0 %v645
    %v713 = vpop.f32.mrb[0].mxu0
    %v714 = vadd.f32 0.0, %v713
    %v715 = vpop.f32.mrb[0].mxu0
    %716 = vdwg.mxu0
    %717 = vst.msk [vmem:[#allocation8] sm:$0xff] %vm75, %v495
    %718 = vst.msk [vmem:[#allocation8 + $0x8] sm:$0xff] %vm75, %v568
    %719 = vst.msk [vmem:[#allocation8 + $0x10] sm:$0xff] %vm75, %v641
    %720 = vst.msk [vmem:[#allocation8 + $0x18] sm:$0xff] %vm75, %v714
    %721 = vst.msk [vmem:[#allocation9] sm:$0xff] %vm380, %v421
    %722 = vst.msk [vmem:[#allocation9 + $0x8] sm:$0xff] %vm380, %v422
    %723 = vst.msk [vmem:[#allocation9 + $0x10] sm:$0xff] %vm380, %v423
    %724 = vst.msk [vmem:[#allocation9 + $0x18] sm:$0xff] %vm380, %v424
    // Predicated region
    $region26: #{scaled_dot_product_attention.1} parent=1 // pred_check
      _
    $region27: #{scaled_dot_product_attention.1} parent=1 // pred_check_branch
      %726 = sbr.rel (0) target = $region29
    $region28: #{scaled_dot_product_attention.1} parent=1 // pred_region
      %s728 = ssub.s32 512, 512
      %729 = vsyncadd [#allocation4], %s728
      %s730 = sshll.u32 [#allocation8], 4
      %s731 = int_to_ptr.vmem [resolvable:$true] %s730
      %736 = dma.vmem_to_hbm [thread:$0]  %s731, 512, %s3, [#allocation4], 128, 128, 8
    $region29: #{scaled_dot_product_attention.1} parent=1 // pred_fallthru
      _
    // Predicated region
    $region30: #{scaled_dot_product_attention.1} parent=1 // pred_check
      _
    $region31: #{scaled_dot_product_attention.1} parent=1 // pred_check_branch
      %738 = sbr.rel (0) target = $region33
    $region32: #{scaled_dot_product_attention.1} parent=1 // pred_region
      %s740 = ssub.s32 512, 512
      %741 = vsyncadd [#allocation10], %s740
      %s742 = sshll.u32 [#allocation9], 4
      %s743 = int_to_ptr.vmem [resolvable:$true] %s742
      %748 = dma.vmem_to_hbm [thread:$0]  %s743, 512, %s4, [#allocation10], 128, 128, 8
    $region33: #{scaled_dot_product_attention.1} parent=1 // pred_fallthru
      _
    // Predicated region
    $region34: #{scaled_dot_product_attention.1} parent=1 // pred_check
      _
    $region35: #{scaled_dot_product_attention.1} parent=1 // pred_check_branch
      %750 = sbr.rel (0) target = $region37
    $region36: #{scaled_dot_product_attention.1} parent=1 // pred_region
      %751 = dma.done [#allocation4], 512
    $region37: #{scaled_dot_product_attention.1} parent=1 // pred_fallthru
      _
    // Predicated region
    $region38: #{scaled_dot_product_attention.1} parent=1 // pred_check
      _
    $region39: #{scaled_dot_product_attention.1} parent=1 // pred_check_branch
      %753 = sbr.rel (0) target = $region41
    $region40: #{scaled_dot_product_attention.1} parent=1 // pred_region
      %754 = dma.done [#allocation10], 512
    $region41: #{scaled_dot_product_attention.1} parent=1 // pred_fallthru
      _
    %755 = vsyncpa [#allocation3], 1
    %756 = vsyncpa [#allocation6], 1
    %757 = vsyncpa [#allocation4], 1
    %758 = vsyncpa [#allocation10], 1

</llo_original>
